<compile_context>
chip_gen: v5e
topology: v5e:2x2
jax: 0.10.0
libtpu: 0.0.40
codegen_flags: <defaults>
</compile_context>

<pallas_src>
import functools

import jax
import jax.numpy as jnp
from jax.experimental import pallas as pl
from jax.experimental.pallas import tpu as pltpu

HIDDEN = 128
REPR = 128
LN_EPS = 1e-5          # matches torch.nn.LayerNorm default (eps inside sqrt)


def _round_up(x, m):
    return (x + m - 1) // m * m


def _ln_relu(x, gamma, beta, eps=LN_EPS):
    """LayerNorm (biased variance, eps inside sqrt, like nn.LayerNorm) + ReLU.

    Two-pass form (mean, then variance of the centered values) for numerical
    robustness; all math in f32.
    """
    mu = jnp.mean(x, axis=-1, keepdims=True)
    xc = x - mu
    var = jnp.mean(xc * xc, axis=-1, keepdims=True)
    inv = jax.lax.rsqrt(var + eps)
    return jnp.maximum(xc * inv * gamma + beta, 0.0)


def prop_encoder_kernel(x_ref, w1_ref, w2_ref, vec_ref, o_ref):
    # vec_ref rows: 0=b1, 1=g1, 2=be1, 3=b2, 4=g2, 5=be2 (rows 6,7 unused pad).
    v = vec_ref[...]

    # Linear 1 on the MXU: in-kernel f32 -> bf16 cast, f32 accumulation.
    x = x_ref[...].astype(jnp.bfloat16)
    h = jnp.dot(x, w1_ref[...], preferred_element_type=jnp.float32) + v[0:1]
    h = _ln_relu(h, v[1:2], v[2:3])

    # Linear 2 on the MXU + fused LayerNorm + ReLU.
    h2 = jnp.dot(h.astype(jnp.bfloat16), w2_ref[...],
                 preferred_element_type=jnp.float32) + v[3:4]
    h2 = _ln_relu(h2, v[4:5], v[5:6])

    o_ref[...] = h2.astype(o_ref.dtype)


@functools.partial(jax.jit, static_argnames=("block_b", "out_dtype"))
def prop_encoder(obs_prop, params, block_b=512, out_dtype=jnp.float32):
    """Fused PropEncoder forward.

    block_b: max rows per grid step (multiple of 16).  The actual tile is
    capped at round_up(cdiv(B, 2), 16) so medium batches still produce >=2
    grid steps (lets the "parallel" axis shard across v7x's two TensorCores).
    Ragged batches are handled by partial edge blocks (no padding copies).
    """
    B, D_in = obs_prop.shape
    w1, b1, g1, be1, w2, b2, g2, be2 = params

    # Batch tile: large (amortizes ~0.35us/step pipeline overhead), multiple
    # of 16 (legal for f32 input and optional bf16 output), >=2 steps when B
    # allows it.
    blk = min(block_b, _round_up(pl.cdiv(B, 2), 16))
    blk = max(blk, 16)
    grid = (pl.cdiv(B, blk),)

    # Small, resident weights in bf16 (one-time tiny cast; halves their bytes).
    w1b = w1.astype(jnp.bfloat16)
    w2b = w2.astype(jnp.bfloat16)

    # Pack the six (1,128) per-feature vectors into one (8,128) operand.
    vecs = jnp.concatenate(
        [b1, g1, be1, b2, g2, be2, jnp.zeros((2, HIDDEN), jnp.float32)], axis=0)

    out = pl.pallas_call(
        prop_encoder_kernel,
        out_shape=jax.ShapeDtypeStruct((B, REPR), out_dtype),
        grid=grid,
        in_specs=[
            pl.BlockSpec((blk, D_in), lambda i: (i, 0)),     # x tile (f32)
            pl.BlockSpec((D_in, HIDDEN), lambda i: (0, 0)),  # w1 (resident)
            pl.BlockSpec((HIDDEN, REPR), lambda i: (0, 0)),  # w2 (resident)
            pl.BlockSpec((8, HIDDEN), lambda i: (0, 0)),     # packed vectors
        ],
        out_specs=pl.BlockSpec((blk, REPR), lambda i: (i, 0)),
        compiler_params=pltpu.CompilerParams(
            dimension_semantics=("parallel",)),
    )(obs_prop, w1b, w2b, vecs)

    return out


def init_params(key, obs_prop_dim):
    """Deterministic synthetic init (scaled normal); params stored f32."""
    # TODO(synk): utils.weight_init (orthogonal init) not reproduced; synthetic
    # scaled-normal init is used instead -- forward math is identical.
    k1, k2 = jax.random.split(key)
    w1 = jax.random.normal(k1, (obs_prop_dim, HIDDEN), jnp.float32) / jnp.sqrt(obs_prop_dim)
    b1 = jnp.zeros((1, HIDDEN), jnp.float32)
    g1 = jnp.ones((1, HIDDEN), jnp.float32)
    be1 = jnp.zeros((1, HIDDEN), jnp.float32)
    w2 = jax.random.normal(k2, (HIDDEN, REPR), jnp.float32) / jnp.sqrt(HIDDEN)
    b2 = jnp.zeros((1, REPR), jnp.float32)
    g2 = jnp.ones((1, REPR), jnp.float32)
    be2 = jnp.zeros((1, REPR), jnp.float32)
    return (w1, b1, g1, be1, w2, b2, g2, be2)


def prop_encoder_ref_bf16(obs_prop, params):
    """Reference matching the kernel's numerics (bf16 matmul inputs, f32 acc/LN)."""
    w1, b1, g1, be1, w2, b2, g2, be2 = params
    x = obs_prop.astype(jnp.bfloat16)
    h = jnp.dot(x, w1.astype(jnp.bfloat16),
                preferred_element_type=jnp.float32) + b1
    h = _ln_relu(h, g1, be1)
    h2 = jnp.dot(h.astype(jnp.bfloat16), w2.astype(jnp.bfloat16),
                 preferred_element_type=jnp.float32) + b2
    return _ln_relu(h2, g2, be2)


def prop_encoder_ref_f32(obs_prop, params):
    """Full-f32 reference (PyTorch-equivalent math: biased var, eps in sqrt)."""
    w1, b1, g1, be1, w2, b2, g2, be2 = params
    h = obs_prop @ w1 + b1
    mu = jnp.mean(h, -1, keepdims=True)
    var = jnp.mean(jnp.square(h - mu), -1, keepdims=True)
    h = jnp.maximum((h - mu) * jax.lax.rsqrt(var + LN_EPS) * g1 + be1, 0.0)
    h2 = h @ w2 + b2
    mu = jnp.mean(h2, -1, keepdims=True)
    var = jnp.mean(jnp.square(h2 - mu), -1, keepdims=True)
    return jnp.maximum((h2 - mu) * jax.lax.rsqrt(var + LN_EPS) * g2 + be2, 0.0)


if __name__ == "__main__":
    key = jax.random.PRNGKey(0)
    k_x, k_p = jax.random.split(key)

    batch = 8
    obs_prop_dim = 32
    obs_prop = jax.random.normal(k_x, (batch, obs_prop_dim), jnp.float32)
    params = init_params(k_p, obs_prop_dim)

    out = prop_encoder(obs_prop, params)
    out = jax.block_until_ready(out)
    assert out.shape == (batch, REPR)

    # Tight check against a reference with matching (bf16-matmul) numerics.
    ref_bf16 = prop_encoder_ref_bf16(obs_prop, params)
    assert jnp.allclose(out, ref_bf16, atol=1e-4, rtol=1e-4), \
        float(jnp.max(jnp.abs(out - ref_bf16)))

    # Loose check against the full-f32 PyTorch-equivalent math.
    ref_f32 = prop_encoder_ref_f32(obs_prop, params)
    assert jnp.allclose(out, ref_f32, atol=5e-2, rtol=5e-2), \
        float(jnp.max(jnp.abs(out - ref_f32)))

    # Non-tile-multiple batch: exercises the ragged (partial edge block) path
    # and a 2-step grid (v7x megacore split).
    obs_big = jax.random.normal(k_x, (37, obs_prop_dim), jnp.float32)
    out_big = jax.block_until_ready(prop_encoder(obs_big, params))
    assert out_big.shape == (37, REPR)
    assert jnp.allclose(out_big, prop_encoder_ref_bf16(obs_big, params),
                        atol=1e-4, rtol=1e-4)

    # Optional bf16 output path (halves writeback traffic).
    out_bf16 = jax.block_until_ready(
        prop_encoder(obs_big, params, out_dtype=jnp.bfloat16))
    assert out_bf16.dtype == jnp.bfloat16 and out_bf16.shape == (37, REPR)
    assert jnp.allclose(out_bf16.astype(jnp.float32),
                        prop_encoder_ref_bf16(obs_big, params),
                        atol=2e-2, rtol=2e-2)

    print("KERNEL_OK")
</pallas_src>

<mosaic_0001>
module attributes {stable_mosaic.version = 11 : i64} {
  func.func @prop_encoder_kernel(%arg0: i32, %arg1: memref<16x32xf32, #tpu.memory_space<vmem>>, %arg2: memref<32x128xbf16, #tpu.memory_space<vmem>>, %arg3: memref<128x128xbf16, #tpu.memory_space<vmem>>, %arg4: memref<8x128xf32, #tpu.memory_space<vmem>>, %arg5: memref<16x128xf32, #tpu.memory_space<vmem>>) attributes {dimension_semantics = [#tpu.dimension_semantics<parallel>], iteration_bounds = array<i64: 1>, scalar_prefetch = 0 : i64, scratch_operands = 0 : i64, tpu.core_type = #tpu.core_type<tc>, window_params = [{transform_indices = @transform_0, window_bounds = array<i64: 16, 32>}, {pipeline_mode = #tpu.pipeline_mode<synchronous>, transform_indices = @transform_1, window_bounds = array<i64: 32, 128>}, {pipeline_mode = #tpu.pipeline_mode<synchronous>, transform_indices = @transform_2, window_bounds = array<i64: 128, 128>}, {pipeline_mode = #tpu.pipeline_mode<synchronous>, transform_indices = @transform_3, window_bounds = array<i64: 8, 128>}, {transform_indices = @transform_4, window_bounds = array<i64: 16, 128>}]} {
    %c0 = arith.constant 0 : index
    %c0_0 = arith.constant 0 : index
    %0 = vector.load %arg4[%c0, %c0_0] : memref<8x128xf32, #tpu.memory_space<vmem>>, vector<8x128xf32>
    %c0_1 = arith.constant 0 : index
    %c0_2 = arith.constant 0 : index
    %1 = vector.load %arg1[%c0_1, %c0_2] : memref<16x32xf32, #tpu.memory_space<vmem>>, vector<16x32xf32>
    %2 = arith.truncf %1 : vector<16x32xf32> to vector<16x32xbf16>
    %c0_3 = arith.constant 0 : index
    %c0_4 = arith.constant 0 : index
    %3 = vector.load %arg2[%c0_3, %c0_4] : memref<32x128xbf16, #tpu.memory_space<vmem>>, vector<32x128xbf16>
    %cst = arith.constant dense<0.000000e+00> : vector<16x128xf32>
    %4 = tpu.matmul %2, %3, %cst {dimension_numbers = #tpu.dot_dimension_numbers<[1], [0], [0], [1], [0, 0, 1, 1], [], []>} : vector<16x32xbf16>, vector<32x128xbf16>, vector<16x128xf32> -> vector<16x128xf32>
    %5 = vector.extract_strided_slice %0 {offsets = [0, 0], sizes = [1, 128], strides = [1, 1]} : vector<8x128xf32> to vector<1x128xf32>
    %6 = vector.broadcast %5 : vector<1x128xf32> to vector<16x128xf32>
    %7 = arith.addf %4, %6 : vector<16x128xf32>
    %8 = vector.extract_strided_slice %0 {offsets = [1, 0], sizes = [1, 128], strides = [1, 1]} : vector<8x128xf32> to vector<1x128xf32>
    %9 = vector.extract_strided_slice %0 {offsets = [2, 0], sizes = [1, 128], strides = [1, 1]} : vector<8x128xf32> to vector<1x128xf32>
    %cst_5 = arith.constant dense<0.000000e+00> : vector<16xf32>
    %10 = vector.multi_reduction <add>, %7, %cst_5 [1] : vector<16x128xf32> to vector<16xf32>
    %11 = vector.shape_cast %10 : vector<16xf32> to vector<16x1xf32>
    %cst_6 = arith.constant 1.280000e+02 : f32
    %12 = vector.broadcast %cst_6 : f32 to vector<16x1xf32>
    %13 = arith.divf %11, %12 : vector<16x1xf32>
    %14 = vector.broadcast %13 : vector<16x1xf32> to vector<16x128xf32>
    %15 = arith.subf %7, %14 : vector<16x128xf32>
    %16 = arith.mulf %15, %15 : vector<16x128xf32>
    %cst_7 = arith.constant dense<0.000000e+00> : vector<16xf32>
    %17 = vector.multi_reduction <add>, %16, %cst_7 [1] : vector<16x128xf32> to vector<16xf32>
    %18 = vector.shape_cast %17 : vector<16xf32> to vector<16x1xf32>
    %cst_8 = arith.constant 1.280000e+02 : f32
    %19 = vector.broadcast %cst_8 : f32 to vector<16x1xf32>
    %20 = arith.divf %18, %19 : vector<16x1xf32>
    %cst_9 = arith.constant 9.99999974E-6 : f32
    %21 = vector.broadcast %cst_9 : f32 to vector<16x1xf32>
    %22 = arith.addf %20, %21 : vector<16x1xf32>
    %23 = math.rsqrt %22 : vector<16x1xf32>
    %24 = vector.broadcast %23 : vector<16x1xf32> to vector<16x128xf32>
    %25 = arith.mulf %15, %24 : vector<16x128xf32>
    %26 = vector.broadcast %8 : vector<1x128xf32> to vector<16x128xf32>
    %27 = arith.mulf %25, %26 : vector<16x128xf32>
    %28 = vector.broadcast %9 : vector<1x128xf32> to vector<16x128xf32>
    %29 = arith.addf %27, %28 : vector<16x128xf32>
    %cst_10 = arith.constant 0.000000e+00 : f32
    %30 = vector.broadcast %cst_10 : f32 to vector<16x128xf32>
    %31 = arith.maximumf %29, %30 : vector<16x128xf32>
    %32 = arith.truncf %31 : vector<16x128xf32> to vector<16x128xbf16>
    %c0_11 = arith.constant 0 : index
    %c0_12 = arith.constant 0 : index
    %33 = vector.load %arg3[%c0_11, %c0_12] : memref<128x128xbf16, #tpu.memory_space<vmem>>, vector<128x128xbf16>
    %cst_13 = arith.constant dense<0.000000e+00> : vector<16x128xf32>
    %34 = tpu.matmul %32, %33, %cst_13 {dimension_numbers = #tpu.dot_dimension_numbers<[1], [0], [0], [1], [0, 0, 1, 1], [], []>} : vector<16x128xbf16>, vector<128x128xbf16>, vector<16x128xf32> -> vector<16x128xf32>
    %35 = vector.extract_strided_slice %0 {offsets = [3, 0], sizes = [1, 128], strides = [1, 1]} : vector<8x128xf32> to vector<1x128xf32>
    %36 = vector.broadcast %35 : vector<1x128xf32> to vector<16x128xf32>
    %37 = arith.addf %34, %36 : vector<16x128xf32>
    %38 = vector.extract_strided_slice %0 {offsets = [4, 0], sizes = [1, 128], strides = [1, 1]} : vector<8x128xf32> to vector<1x128xf32>
    %39 = vector.extract_strided_slice %0 {offsets = [5, 0], sizes = [1, 128], strides = [1, 1]} : vector<8x128xf32> to vector<1x128xf32>
    %cst_14 = arith.constant dense<0.000000e+00> : vector<16xf32>
    %40 = vector.multi_reduction <add>, %37, %cst_14 [1] : vector<16x128xf32> to vector<16xf32>
    %41 = vector.shape_cast %40 : vector<16xf32> to vector<16x1xf32>
    %cst_15 = arith.constant 1.280000e+02 : f32
    %42 = vector.broadcast %cst_15 : f32 to vector<16x1xf32>
    %43 = arith.divf %41, %42 : vector<16x1xf32>
    %44 = vector.broadcast %43 : vector<16x1xf32> to vector<16x128xf32>
    %45 = arith.subf %37, %44 : vector<16x128xf32>
    %46 = arith.mulf %45, %45 : vector<16x128xf32>
    %cst_16 = arith.constant dense<0.000000e+00> : vector<16xf32>
    %47 = vector.multi_reduction <add>, %46, %cst_16 [1] : vector<16x128xf32> to vector<16xf32>
    %48 = vector.shape_cast %47 : vector<16xf32> to vector<16x1xf32>
    %cst_17 = arith.constant 1.280000e+02 : f32
    %49 = vector.broadcast %cst_17 : f32 to vector<16x1xf32>
    %50 = arith.divf %48, %49 : vector<16x1xf32>
    %cst_18 = arith.constant 9.99999974E-6 : f32
    %51 = vector.broadcast %cst_18 : f32 to vector<16x1xf32>
    %52 = arith.addf %50, %51 : vector<16x1xf32>
    %53 = math.rsqrt %52 : vector<16x1xf32>
    %54 = vector.broadcast %53 : vector<16x1xf32> to vector<16x128xf32>
    %55 = arith.mulf %45, %54 : vector<16x128xf32>
    %56 = vector.broadcast %38 : vector<1x128xf32> to vector<16x128xf32>
    %57 = arith.mulf %55, %56 : vector<16x128xf32>
    %58 = vector.broadcast %39 : vector<1x128xf32> to vector<16x128xf32>
    %59 = arith.addf %57, %58 : vector<16x128xf32>
    %cst_19 = arith.constant 0.000000e+00 : f32
    %60 = vector.broadcast %cst_19 : f32 to vector<16x128xf32>
    %61 = arith.maximumf %59, %60 : vector<16x128xf32>
    %c0_20 = arith.constant 0 : index
    %c0_21 = arith.constant 0 : index
    %62 = vector.load %arg5[%c0_20, %c0_21] : memref<16x128xf32, #tpu.memory_space<vmem>>, vector<16x128xf32>
    tpu.vector_store %arg5[%c0_20, %c0_21], %61 {strides = array<i32>} : memref<16x128xf32, #tpu.memory_space<vmem>>, vector<16x128xf32>,
    return
  }
  func.func @transform_0(%arg0: i32) -> (i32, i32) {
    %c0_i32 = arith.constant 0 : i32
    %c0_i32_0 = arith.constant 0 : i32
    return %arg0, %c0_i32 : i32, i32
  }
  func.func @transform_1(%arg0: i32) -> (i32, i32) {
    %c0_i32 = arith.constant 0 : i32
    %c0_i32_0 = arith.constant 0 : i32
    %c0_i32_1 = arith.constant 0 : i32
    return %c0_i32, %c0_i32_0 : i32, i32
  }
  func.func @transform_2(%arg0: i32) -> (i32, i32) {
    %c0_i32 = arith.constant 0 : i32
    %c0_i32_0 = arith.constant 0 : i32
    %c0_i32_1 = arith.constant 0 : i32
    return %c0_i32, %c0_i32_0 : i32, i32
  }
  func.func @transform_3(%arg0: i32) -> (i32, i32) {
    %c0_i32 = arith.constant 0 : i32
    %c0_i32_0 = arith.constant 0 : i32
    %c0_i32_1 = arith.constant 0 : i32
    return %c0_i32, %c0_i32_0 : i32, i32
  }
  func.func @transform_4(%arg0: i32) -> (i32, i32) {
    %c0_i32 = arith.constant 0 : i32
    %c0_i32_0 = arith.constant 0 : i32
    return %arg0, %c0_i32 : i32, i32
  }
}

</mosaic_0001>

<llo_original>
// kernel: prop_encoder.1
$region0: #{prop_encoder.1}
  #allocation0 [shape = 'u32[]', space=smem, size = 0x4, offset = 0x4, fixed_abs, tag = 'smem constant byte address 0x4 - core index']
  #allocation1 [shape = 'u32[72,128]{1,0:T(1,128)}', space=vmem, size = 0x9000, scoped, tag = 'internal scratch']
  %s0 = inlined_call_operand.vmem [shape: f32[8,32], index: 0, kind: input, shape index: {}]
  %s1 = inlined_call_operand.vmem [shape: bf16[32,128], index: 1, kind: input, shape index: {}]
  %s2 = inlined_call_operand.vmem [shape: bf16[128,128], index: 2, kind: input, shape index: {}]
  %s3 = inlined_call_operand.vmem [shape: f32[8,128], index: 3, kind: input, shape index: {}]
  %s4 = inlined_call_operand.hbm [shape: f32[8,128], index: 4, kind: output, shape index: {}]
  %s5 = sld [smem:[#allocation0]]
  $region26: #{prop_encoder.1} parent=0
    _
  %s7 = ssub.s32 1, %s5
  %s8 = scalar_select 0, %s7, %s5
  $region1: #{prop_encoder.1} parent=0
    #allocation2 [shape = 'u8[8192]{0}', space=vmem, size = 0x2000, scoped, tag = 'output window, operand 0, single buffered']
    #allocation3 [shape = 's32[1]{0}', space=sflag, size = 0x4, scoped, tag = 'scoped memory for prop_encoder.1']
    %9 = vsyncpa [#allocation3], 0
    // Predicated region
    $region2: #{prop_encoder.1} parent=1 // pred_check
      _
    $region3: #{prop_encoder.1} parent=1 // pred_check_branch
      %11 = sbr.rel (0) target = $region5
    $region4: #{prop_encoder.1} parent=1 // pred_region
      _
    $region5: #{prop_encoder.1} parent=1 // pred_fallthru
      _
    // Predicated region
    $region6: #{prop_encoder.1} parent=1 // pred_check
      _
    $region7: #{prop_encoder.1} parent=1 // pred_check_branch
      %13 = sbr.rel (0) target = $region9
    $region8: #{prop_encoder.1} parent=1 // pred_region
      _
    $region9: #{prop_encoder.1} parent=1 // pred_fallthru
      _
    // Predicated region
    $region10: #{prop_encoder.1} parent=1 // pred_check
      _
    $region11: #{prop_encoder.1} parent=1 // pred_check_branch
      %15 = sbr.rel (0) target = $region13
    $region12: #{prop_encoder.1} parent=1 // pred_region
      _
    $region13: #{prop_encoder.1} parent=1 // pred_fallthru
      _
    // Predicated region
    $region14: #{prop_encoder.1} parent=1 // pred_check
      _
    $region15: #{prop_encoder.1} parent=1 // pred_check_branch
      %17 = sbr.rel (0) target = $region17
    $region16: #{prop_encoder.1} parent=1 // pred_region
      _
    $region17: #{prop_encoder.1} parent=1 // pred_fallthru
      _
    %v19 = vld [vmem:[%s3] sm:$0xff]
    %v20 = vld [vmem:[%s0] sm:$0xff]
    %v21 = vld [vmem:[%s0 + $0x8] sm:$0xff]
    %v22 = vpack.c.bf16 %v21, %v20
    %v23 = vld [vmem:[%s1] sm:$0xf]
    %v24 = vld [vmem:[%s1 + $0x4] sm:$0xf]
    %v25 = vld [vmem:[%s1 + $0x8] sm:$0xf]
    %v26 = vld [vmem:[%s1 + $0xc] sm:$0xf]
    %v27 = vperm.slane %v19, 0
    %v32 = vunpack.c.l.b16 %v23
    %v33 = vunpack.c.l.b16 %v24
    %v34 = vunpack.c.l.b16 %v25
    %v35 = vunpack.c.l.b16 %v26
    %v36 = vpack.c.b16 %v33, %v32
    %v37 = vpack.c.b16 %v35, %v34
    %vm40 = vcmask 261120
    %v42 = vsel %vm40, %v22, 0
    %44 = vmatpush.bf16.msra.mxu0 0
    %45 = vmatpush.bf16.msra.mxu0 0
    %46 = vmatpush.bf16.msra.mxu0 0
    %47 = vmatpush.bf16.msra.mxu0 0
    %48 = vmatpush.bf16.msra.mxu0 0
    %49 = vmatpush.bf16.msra.mxu0 0
    %50 = vmatpush.bf16.msra.mxu0 %v37
    %51 = vmatpush.bf16.msra.mxu0 %v36
    %52 = vmatmul.bf16.gmra.mxu0 %v42
    %v53 = vpop.f32.mrf.mxu0
    %v54 = vadd.f32 %v27, %v53
    %v55 = vpop.f32.mrf.mxu0
    %v56 = vadd.f32 %v27, %v55
    %57 = vdwg.mxu0
    %58 = vadd.xlane.f32.xlu0 %v54
    %v59 = vpop.xlane.xlu0 %58
    %60 = vadd.xlane.f32.xlu0 %v56
    %v61 = vpop.xlane.xlu0 %60
    %v62 = vrcp.pop 128.0
    %v63 = vmul.f32 128.0, %v62
    %v64 = vsub.f32 1.0, %v63
    %v65 = vmul.f32 %v62, %v64
    %v66 = vadd.f32 %v62, %v65
    %vm67 = vweird.f32 %v62
    %v68 = vsel %vm67, %v62, %v66
    %v69 = vmul.f32 %v59, %v68
    %v70 = vmul.f32 %v61, %v68
    %v71 = vsub.f32 %v54, %v69
    %v72 = vsub.f32 %v56, %v70
    %v73 = vmul.f32 %v71, %v71
    %v74 = vmul.f32 %v72, %v72
    %75 = vadd.xlane.f32.xlu0 %v73
    %v76 = vpop.xlane.xlu0 %75
    %77 = vadd.xlane.f32.xlu0 %v74
    %v78 = vpop.xlane.xlu0 %77
    %v79 = vmul.f32 %v76, %v68
    %v80 = vmul.f32 %v78, %v68
    %v81 = vadd.f32 %v79, 1e-05
    %v82 = vadd.f32 %v80, 1e-05
    %v83 = vrsqrt.pop %v81
    %v84 = vmul.f32 %v83, %v81
    %v85 = vmul.f32 %v84, %v83
    %v86 = vmul.f32 0.5, %v85
    %v87 = vsub.f32 1.5, %v86
    %v88 = vmul.f32 %v83, %v87
    %vm89 = vweird.f32 %v81
    %vm90 = vweird.f32 %v83
    %vm91 = vmor %vm89, %vm90
    %v92 = vsel %vm91, %v83, %v88
    %v93 = vrsqrt.pop %v82
    %v94 = vmul.f32 %v93, %v82
    %v95 = vmul.f32 %v94, %v93
    %v96 = vmul.f32 0.5, %v95
    %v97 = vsub.f32 1.5, %v96
    %v98 = vmul.f32 %v93, %v97
    %vm99 = vweird.f32 %v82
    %vm100 = vweird.f32 %v93
    %vm101 = vmor %vm99, %vm100
    %v102 = vsel %vm101, %v93, %v98
    %v103 = vmul.f32 %v71, %v92
    %v104 = vmul.f32 %v72, %v102
    %v105 = vperm.slane %v19, 1
    %v106 = vmul.f32 %v103, %v105
    %v107 = vmul.f32 %v104, %v105
    %v108 = vperm.slane %v19, 2
    %v109 = vadd.f32 %v106, %v108
    %v110 = vadd.f32 %v107, %v108
    %v111 = vmax.f32 %v109, 0.0
    %v112 = vmax.f32 %v110, 0.0
    %v113 = vpack.c.bf16 %v112, %v111
    %v114 = vld [vmem:[%s2] sm:$0xf]
    %v115 = vld [vmem:[%s2 + $0x4] sm:$0xf]
    %v116 = vld [vmem:[%s2 + $0x8] sm:$0xf]
    %v117 = vld [vmem:[%s2 + $0xc] sm:$0xf]
    %v118 = vld [vmem:[%s2 + $0x10] sm:$0xf]
    %v119 = vld [vmem:[%s2 + $0x14] sm:$0xf]
    %v120 = vld [vmem:[%s2 + $0x18] sm:$0xf]
    %v121 = vld [vmem:[%s2 + $0x1c] sm:$0xf]
    %v122 = vld [vmem:[%s2 + $0x20] sm:$0xf]
    %v123 = vld [vmem:[%s2 + $0x24] sm:$0xf]
    %v124 = vld [vmem:[%s2 + $0x28] sm:$0xf]
    %v125 = vld [vmem:[%s2 + $0x2c] sm:$0xf]
    %v126 = vld [vmem:[%s2 + $0x30] sm:$0xf]
    %v127 = vld [vmem:[%s2 + $0x34] sm:$0xf]
    %v128 = vld [vmem:[%s2 + $0x38] sm:$0xf]
    %v129 = vld [vmem:[%s2 + $0x3c] sm:$0xf]
    %v130 = vperm.slane %v19, 3
    %v147 = vunpack.c.l.b16 %v114
    %v148 = vunpack.c.l.b16 %v115
    %v149 = vunpack.c.l.b16 %v116
    %v150 = vunpack.c.l.b16 %v117
    %v151 = vunpack.c.l.b16 %v118
    %v152 = vunpack.c.l.b16 %v119
    %v153 = vunpack.c.l.b16 %v120
    %v154 = vunpack.c.l.b16 %v121
    %v155 = vunpack.c.l.b16 %v122
    %v156 = vunpack.c.l.b16 %v123
    %v157 = vunpack.c.l.b16 %v124
    %v158 = vunpack.c.l.b16 %v125
    %v159 = vunpack.c.l.b16 %v126
    %v160 = vunpack.c.l.b16 %v127
    %v161 = vunpack.c.l.b16 %v128
    %v162 = vunpack.c.l.b16 %v129
    %v163 = vpack.c.b16 %v148, %v147
    %v164 = vpack.c.b16 %v150, %v149
    %v165 = vpack.c.b16 %v152, %v151
    %v166 = vpack.c.b16 %v154, %v153
    %v167 = vpack.c.b16 %v156, %v155
    %v168 = vpack.c.b16 %v158, %v157
    %v169 = vpack.c.b16 %v160, %v159
    %v170 = vpack.c.b16 %v162, %v161
    %179 = vmatpush.bf16.msra.mxu0 %v170
    %180 = vmatpush.bf16.msra.mxu0 %v169
    %181 = vmatpush.bf16.msra.mxu0 %v168
    %182 = vmatpush.bf16.msra.mxu0 %v167
    %183 = vmatpush.bf16.msra.mxu0 %v166
    %184 = vmatpush.bf16.msra.mxu0 %v165
    %185 = vmatpush.bf16.msra.mxu0 %v164
    %186 = vmatpush.bf16.msra.mxu0 %v163
    %187 = vmatmul.bf16.gmra.mxu0 %v113
    %v188 = vpop.f32.mrf.mxu0
    %v189 = vadd.f32 %v130, %v188
    %v190 = vpop.f32.mrf.mxu0
    %v191 = vadd.f32 %v130, %v190
    %192 = vdwg.mxu0
    %193 = vadd.xlane.f32.xlu0 %v189
    %v194 = vpop.xlane.xlu0 %193
    %195 = vadd.xlane.f32.xlu0 %v191
    %v196 = vpop.xlane.xlu0 %195
    %v197 = vmul.f32 %v194, %v68
    %v198 = vmul.f32 %v196, %v68
    %v199 = vsub.f32 %v189, %v197
    %v200 = vsub.f32 %v191, %v198
    %v201 = vmul.f32 %v199, %v199
    %v202 = vmul.f32 %v200, %v200
    %203 = vadd.xlane.f32.xlu0 %v201
    %v204 = vpop.xlane.xlu0 %203
    %205 = vadd.xlane.f32.xlu0 %v202
    %v206 = vpop.xlane.xlu0 %205
    %v207 = vmul.f32 %v204, %v68
    %v208 = vmul.f32 %v206, %v68
    %v209 = vadd.f32 %v207, 1e-05
    %v210 = vadd.f32 %v208, 1e-05
    %v211 = vrsqrt.pop %v209
    %v212 = vmul.f32 %v211, %v209
    %v213 = vmul.f32 %v212, %v211
    %v214 = vmul.f32 0.5, %v213
    %v215 = vsub.f32 1.5, %v214
    %v216 = vmul.f32 %v211, %v215
    %vm217 = vweird.f32 %v209
    %vm218 = vweird.f32 %v211
    %vm219 = vmor %vm217, %vm218
    %v220 = vsel %vm219, %v211, %v216
    %v221 = vrsqrt.pop %v210
    %v222 = vmul.f32 %v221, %v210
    %v223 = vmul.f32 %v222, %v221
    %v224 = vmul.f32 0.5, %v223
    %v225 = vsub.f32 1.5, %v224
    %v226 = vmul.f32 %v221, %v225
    %vm227 = vweird.f32 %v210
    %vm228 = vweird.f32 %v221
    %vm229 = vmor %vm227, %vm228
    %v230 = vsel %vm229, %v221, %v226
    %v231 = vmul.f32 %v199, %v220
    %v232 = vmul.f32 %v200, %v230
    %v233 = vperm.slane %v19, 4
    %v234 = vmul.f32 %v231, %v233
    %v235 = vmul.f32 %v232, %v233
    %v236 = vperm.slane %v19, 5
    %v237 = vadd.f32 %v234, %v236
    %v238 = vadd.f32 %v235, %v236
    %v239 = vmax.f32 %v237, 0.0
    %v240 = vmax.f32 %v238, 0.0
    %241 = vst [vmem:[#allocation2] sm:$0xff] %v239
    %242 = vst [vmem:[#allocation2 + $0x8] sm:$0xff] %v240
    // Predicated region
    $region18: #{prop_encoder.1} parent=1 // pred_check
      _
    $region19: #{prop_encoder.1} parent=1 // pred_check_branch
      %244 = sbr.rel (0) target = $region21
    $region20: #{prop_encoder.1} parent=1 // pred_region
      %246 = vsyncadd [#allocation3], 128
      %s247 = sshll.u32 [#allocation2], 4
      %s248 = int_to_ptr.vmem [resolvable:$true] %s247
      %s249 = sshll.u32 %s4, 4
      %s250 = int_to_ptr.hbm [resolvable:$true] %s249
      %255 = dma.vmem_to_hbm [thread:$0]  %s248, 128, %s250, [#allocation3], 128, 128, 8
    $region21: #{prop_encoder.1} parent=1 // pred_fallthru
      _
    // Predicated region
    $region22: #{prop_encoder.1} parent=1 // pred_check
      _
    $region23: #{prop_encoder.1} parent=1 // pred_check_branch
      %257 = sbr.rel (0) target = $region25
    $region24: #{prop_encoder.1} parent=1 // pred_region
      %259 = dma.done [#allocation3], 256
    $region25: #{prop_encoder.1} parent=1 // pred_fallthru
      _
    %260 = vsyncpa [#allocation3], 1

</llo_original>
